<compile_context>
chip_gen: v7x
topology: tpu7x:2x2x1
jax: 0.10.0
libtpu: 0.0.40
codegen_flags: <defaults>
</compile_context>

<pallas_src>
import jax
import jax.numpy as jnp
from jax.experimental import pallas as pl
from jax.experimental.pallas import tpu as pltpu


def one_word_psd_probe(batch, proj, *, tm=None, stream_bf16=False):
    """batch: (B, S, D) float32, proj: (D, R) float32 -> (B, S) float32."""
    B, S, D = batch.shape
    Dp, R = proj.shape
    assert D == Dp

    N = B * S
    x = batch.reshape(N, D)

    if stream_bf16:
        # Opt-in throughput mode: halve HBM reads of the streamed operand.
        x = x.astype(jnp.bfloat16)
        proj = proj.astype(jnp.bfloat16)
        precision = jax.lax.Precision.DEFAULT
    else:
        precision = jax.lax.Precision.HIGHEST

    # ---- Token-tile selection from a VMEM budget (not a fixed constant) ----
    bytes_per_row = D * x.dtype.itemsize
    if tm is None:
        # Target ~4 MiB per x block; big enough to amortize per-step overhead
        # even at v7x HBM bandwidth.
        tm = max(256, (4 * 1024 * 1024) // bytes_per_row)
    # Cap the double-buffered x footprint at 16 MiB (safe on v5e/v6e/v7x once
    # vmem_limit_bytes below is applied).
    x_dbuf_budget = 16 * 1024 * 1024
    tm = min(tm, max(8, x_dbuf_budget // (2 * bytes_per_row)))
    # Don't exceed the (sublane-rounded) token count for tiny inputs.
    tm = min(tm, -(-N // 8) * 8)
    # Round to a multiple of 256 (fills the 256-wide MXU M dim on v6e/v7x);
    # fall back to the sublane quantum for genuinely tiny N.
    if tm >= 256:
        tm = (tm // 256) * 256
    else:
        tm = max(8, (tm // 8) * 8)

    num_tiles = pl.cdiv(N, tm)

    # ---- Explicit VMEM limit so larger tiles compile on every generation ----
    proj_bytes = D * R * proj.dtype.itemsize
    out_bytes = 2 * tm * 4
    vmem_need = 2 * tm * bytes_per_row + 2 * proj_bytes + out_bytes
    vmem_limit = int(min(48 * 1024 * 1024,
                         max(32 * 1024 * 1024, vmem_need + (4 << 20))))

    def kernel(x_ref, proj_ref, out_ref):
        # x_ref:    (TM, D) tile of flattened tokens (VMEM, streamed)
        # proj_ref: (D, R)  resident projection (VMEM)
        # out_ref:  (1, 1, TM) lane-dense squared norms for this tile
        t = jnp.dot(x_ref[...], proj_ref[...],
                    preferred_element_type=jnp.float32,
                    precision=precision)                      # (TM, R) f32
        norms = jnp.sum(t * t, axis=-1, keepdims=True)        # (TM, 1) f32
        # Column -> lane-dense row (XLU transpose) so the writeback uses full
        # unmasked vector stores.
        out_ref[...] = jnp.transpose(norms, (1, 0))[None].astype(out_ref.dtype)

    out = pl.pallas_call(
        kernel,
        out_shape=jax.ShapeDtypeStruct((num_tiles, 1, tm), jnp.float32),
        grid_spec=pl.GridSpec(
            grid=(num_tiles,),
            in_specs=[
                # x streams in TM-row tiles (double-buffered by Pallas); the
                # ragged last block reads don't-care rows (sliced off below).
                pl.BlockSpec((tm, D), lambda i: (i, 0)),
                # proj: constant index_map -> stays resident in VMEM.
                pl.BlockSpec((D, R), lambda i: (0, 0)),
            ],
            out_specs=pl.BlockSpec((1, 1, tm), lambda i: (i, 0, 0)),
        ),
        compiler_params=pltpu.CompilerParams(
            # Independent token tiles: shards across both TCs on v7x.
            dimension_semantics=("parallel",),
            vmem_limit_bytes=vmem_limit,
        ),
        cost_estimate=pl.CostEstimate(
            flops=2 * N * D * R + 2 * N * R,
            transcendentals=0,
            bytes_accessed=N * bytes_per_row + proj_bytes + N * 4,
        ),
    )(x, proj)

    # Valid tokens only; garbage rows from the ragged last block are dropped.
    return out.reshape(-1)[:N].reshape(B, S)


if __name__ == "__main__":
    # Small shapes consistent with the module's forward:
    # (batch_size, max_seq_len, representation_dim) with probe_rank = 128.
    B, S, D, R = 2, 8, 256, 128

    key = jax.random.PRNGKey(0)
    k_x, k_p = jax.random.split(key)

    batch = jax.random.normal(k_x, (B, S, D), dtype=jnp.float32)
    # nn.init.uniform_(proj, -0.05, 0.05), deterministic synthetic init.
    proj = jax.random.uniform(k_p, (D, R), dtype=jnp.float32,
                              minval=-0.05, maxval=0.05)

    out = one_word_psd_probe(batch, proj)
    out = jax.block_until_ready(out)

    # Reference check in plain JAX (same f32 precision as the kernel).
    t_ref = jnp.matmul(batch, proj, precision=jax.lax.Precision.HIGHEST)
    ref = jnp.sum(t_ref * t_ref, axis=-1)
    assert out.shape == (B, S)
    assert jnp.allclose(out, ref, rtol=1e-5, atol=1e-5)

    print("KERNEL_OK")
</pallas_src>

<mosaic_0001>
module attributes {stable_mosaic.version = 11 : i64} {
  func.func @kernel(%arg0: i32, %arg1: memref<16x256xf32, #tpu.memory_space<vmem>>, %arg2: memref<256x128xf32, #tpu.memory_space<vmem>>, %arg3: memref<1x1x16xf32, #tpu.memory_space<vmem>>) attributes {dimension_semantics = [#tpu.dimension_semantics<parallel>], iteration_bounds = array<i64: 1>, scalar_prefetch = 0 : i64, scratch_operands = 0 : i64, tpu.core_type = #tpu.core_type<tc>, window_params = [{transform_indices = @transform_0, window_bounds = array<i64: 16, 256>}, {pipeline_mode = #tpu.pipeline_mode<synchronous>, transform_indices = @transform_1, window_bounds = array<i64: 256, 128>}, {transform_indices = @transform_2, window_bounds = array<i64: 1, 1, 16>}]} {
    %c0 = arith.constant 0 : index
    %c0_0 = arith.constant 0 : index
    %0 = vector.load %arg1[%c0, %c0_0] : memref<16x256xf32, #tpu.memory_space<vmem>>, vector<16x256xf32>
    %c0_1 = arith.constant 0 : index
    %c0_2 = arith.constant 0 : index
    %1 = vector.load %arg2[%c0_1, %c0_2] : memref<256x128xf32, #tpu.memory_space<vmem>>, vector<256x128xf32>
    %cst = arith.constant dense<0.000000e+00> : vector<16x128xf32>
    %2 = tpu.matmul %0, %1, %cst {dimension_numbers = #tpu.dot_dimension_numbers<[1], [0], [0], [1], [0, 0, 1, 1], [], []>, precision = #tpu.contract_precision<fp32>} : vector<16x256xf32>, vector<256x128xf32>, vector<16x128xf32> -> vector<16x128xf32>
    %3 = arith.mulf %2, %2 : vector<16x128xf32>
    %cst_3 = arith.constant dense<0.000000e+00> : vector<16xf32>
    %4 = vector.multi_reduction <add>, %3, %cst_3 [1] : vector<16x128xf32> to vector<16xf32>
    %5 = vector.shape_cast %4 : vector<16xf32> to vector<16x1xf32>
    %6 = tpu.transpose %5, [1, 0] : vector<16x1xf32> -> vector<1x16xf32>
    %7 = vector.shape_cast %6 : vector<1x16xf32> to vector<1x1x16xf32>
    %c0_4 = arith.constant 0 : index
    %c0_5 = arith.constant 0 : index
    %c0_6 = arith.constant 0 : index
    %8 = vector.load %arg3[%c0_4, %c0_5, %c0_6] : memref<1x1x16xf32, #tpu.memory_space<vmem>>, vector<1x1x16xf32>
    tpu.vector_store %arg3[%c0_4, %c0_5, %c0_6], %7 {strides = array<i32>} : memref<1x1x16xf32, #tpu.memory_space<vmem>>, vector<1x1x16xf32>,
    return
  }
  func.func @transform_0(%arg0: i32) -> (i32, i32) {
    %c0_i32 = arith.constant 0 : i32
    %c0_i32_0 = arith.constant 0 : i32
    return %arg0, %c0_i32 : i32, i32
  }
  func.func @transform_1(%arg0: i32) -> (i32, i32) {
    %c0_i32 = arith.constant 0 : i32
    %c0_i32_0 = arith.constant 0 : i32
    %c0_i32_1 = arith.constant 0 : i32
    return %c0_i32, %c0_i32_0 : i32, i32
  }
  func.func @transform_2(%arg0: i32) -> (i32, i32, i32) {
    %c0_i32 = arith.constant 0 : i32
    %c0_i32_0 = arith.constant 0 : i32
    %c0_i32_1 = arith.constant 0 : i32
    return %arg0, %c0_i32, %c0_i32_0 : i32, i32, i32
  }
}

</mosaic_0001>

<llo_original>
// kernel: tpu_custom_call.1
$region0: #{tpu_custom_call.1}
  #allocation0 [shape = 'u32[]', space=smem, size = 0x4, offset = 0x4, fixed_abs, tag = 'smem constant byte address 0x4 - core index']
  #allocation1 [shape = 'u32[144,128]{1,0:T(1,128)}', space=vmem, size = 0x12000, scoped, tag = 'internal scratch']
  %s0 = inlined_call_operand.hbm [shape: f32[16,256], index: 0, kind: input, shape index: {}]
  %s1 = inlined_call_operand.hbm [shape: f32[256,128], index: 1, kind: input, shape index: {}]
  %s2 = inlined_call_operand.hbm [shape: f32[1,1,16], index: 2, kind: output, shape index: {}]
  %s3 = sld [smem:[#allocation0]]
  $region26: #{tpu_custom_call.1} parent=0
    _
  %s5 = ssub.s32 1, %s3
  %s6 = scalar_select 0, %s5, %s3
  $region1: #{tpu_custom_call.1} parent=0
    #allocation2 [shape = 'u8[16384]{0}', space=vmem, size = 0x4000, scoped, tag = 'input window, operand 0, single buffered']
    #allocation3 [shape = 's32[1]{0}', space=sflag, size = 0x4, scoped, tag = 'scoped memory for tpu_custom_call.1']
    #allocation4 [shape = 's32[1]{0}', space=sflag, size = 0x4, scoped, tag = 'scoped memory for tpu_custom_call.1']
    #allocation5 [shape = 'u8[131072]{0}', space=vmem, size = 0x20000, scoped, tag = 'input window, operand 1, single buffered']
    #allocation6 [shape = 's32[1]{0}', space=sflag, size = 0x4, scoped, tag = 'scoped memory for tpu_custom_call.1']
    #allocation7 [shape = 'u8[512]{0}', space=vmem, size = 0x400, scoped, tag = 'output window, operand 0, single buffered']
    %7 = vsyncpa [#allocation3], 0
    %8 = vsyncpa [#allocation6], 0
    %9 = vsyncpa [#allocation4], 0
    // Predicated region
    $region2: #{tpu_custom_call.1} parent=1 // pred_check
      _
    $region3: #{tpu_custom_call.1} parent=1 // pred_check_branch
      %11 = sbr.rel (0) target = $region5
    $region4: #{tpu_custom_call.1} parent=1 // pred_region
      %s13 = ssub.s32 512, 512
      %14 = vsyncadd [#allocation3], %s13
      %s15 = sshll.u32 [#allocation2], 4
      %s16 = int_to_ptr.vmem [resolvable:$true] %s15
      %21 = dma.hbm_to_vmem [thread:$0]  %s0, 512, %s16, [#allocation3], 256, 256, 16
    $region5: #{tpu_custom_call.1} parent=1 // pred_fallthru
      _
    // Predicated region
    $region6: #{tpu_custom_call.1} parent=1 // pred_check
      _
    $region7: #{tpu_custom_call.1} parent=1 // pred_check_branch
      %23 = sbr.rel (0) target = $region9
    $region8: #{tpu_custom_call.1} parent=1 // pred_region
      %s25 = ssub.s32 4096, 4096
      %26 = vsyncadd [#allocation6], %s25
      %s27 = sshll.u32 [#allocation5], 4
      %s28 = int_to_ptr.vmem [resolvable:$true] %s27
      %33 = dma.hbm_to_vmem [thread:$0]  %s1, 4096, %s28, [#allocation6], 128, 128, 8
    $region9: #{tpu_custom_call.1} parent=1 // pred_fallthru
      _
    // Predicated region
    $region10: #{tpu_custom_call.1} parent=1 // pred_check
      _
    $region11: #{tpu_custom_call.1} parent=1 // pred_check_branch
      %35 = sbr.rel (0) target = $region13
    $region12: #{tpu_custom_call.1} parent=1 // pred_region
      %36 = dma.done [#allocation3], 512
    $region13: #{tpu_custom_call.1} parent=1 // pred_fallthru
      _
    // Predicated region
    $region14: #{tpu_custom_call.1} parent=1 // pred_check
      _
    $region15: #{tpu_custom_call.1} parent=1 // pred_check_branch
      %38 = sbr.rel (0) target = $region17
    $region16: #{tpu_custom_call.1} parent=1 // pred_region
      %39 = dma.done [#allocation6], 4096
    $region17: #{tpu_custom_call.1} parent=1 // pred_fallthru
      _
    %v40 = vld [vmem:[#allocation2] sm:$0xff]
    %v41 = vld [vmem:[#allocation2 + $0x8] sm:$0xff]
    %v42 = vld [vmem:[#allocation2 + $0x10] sm:$0xff]
    %v43 = vld [vmem:[#allocation2 + $0x18] sm:$0xff]
    %v44 = vld [vmem:[#allocation5] sm:$0xff]
    %v45 = vld [vmem:[#allocation5 + $0x8] sm:$0xff]
    %v46 = vld [vmem:[#allocation5 + $0x10] sm:$0xff]
    %v47 = vld [vmem:[#allocation5 + $0x18] sm:$0xff]
    %v48 = vld [vmem:[#allocation5 + $0x20] sm:$0xff]
    %v49 = vld [vmem:[#allocation5 + $0x28] sm:$0xff]
    %v50 = vld [vmem:[#allocation5 + $0x30] sm:$0xff]
    %v51 = vld [vmem:[#allocation5 + $0x38] sm:$0xff]
    %v52 = vld [vmem:[#allocation5 + $0x40] sm:$0xff]
    %v53 = vld [vmem:[#allocation5 + $0x48] sm:$0xff]
    %v54 = vld [vmem:[#allocation5 + $0x50] sm:$0xff]
    %v55 = vld [vmem:[#allocation5 + $0x58] sm:$0xff]
    %v56 = vld [vmem:[#allocation5 + $0x60] sm:$0xff]
    %v57 = vld [vmem:[#allocation5 + $0x68] sm:$0xff]
    %v58 = vld [vmem:[#allocation5 + $0x70] sm:$0xff]
    %v59 = vld [vmem:[#allocation5 + $0x78] sm:$0xff]
    %v60 = vld [vmem:[#allocation5 + $0x80] sm:$0xff]
    %v61 = vld [vmem:[#allocation5 + $0x88] sm:$0xff]
    %v62 = vld [vmem:[#allocation5 + $0x90] sm:$0xff]
    %v63 = vld [vmem:[#allocation5 + $0x98] sm:$0xff]
    %v64 = vld [vmem:[#allocation5 + $0xa0] sm:$0xff]
    %v65 = vld [vmem:[#allocation5 + $0xa8] sm:$0xff]
    %v66 = vld [vmem:[#allocation5 + $0xb0] sm:$0xff]
    %v67 = vld [vmem:[#allocation5 + $0xb8] sm:$0xff]
    %v68 = vld [vmem:[#allocation5 + $0xc0] sm:$0xff]
    %v69 = vld [vmem:[#allocation5 + $0xc8] sm:$0xff]
    %v70 = vld [vmem:[#allocation5 + $0xd0] sm:$0xff]
    %v71 = vld [vmem:[#allocation5 + $0xd8] sm:$0xff]
    %v72 = vld [vmem:[#allocation5 + $0xe0] sm:$0xff]
    %v73 = vld [vmem:[#allocation5 + $0xe8] sm:$0xff]
    %v74 = vld [vmem:[#allocation5 + $0xf0] sm:$0xff]
    %v75 = vld [vmem:[#allocation5 + $0xf8] sm:$0xff]
    %76 = vmatprep.subr.mxu0 0.0
    %v77 = vand.u32 %v44, 4294901760
    %78 = vmatpush1.msra.mxu0 %v77
    %79 = vmatprep.subr.mxu0 0.0
    %v80 = vand.u32 %v45, 4294901760
    %81 = vmatpush1.msra.mxu0 %v80
    %82 = vmatprep.subr.mxu0 0.0
    %v83 = vand.u32 %v46, 4294901760
    %84 = vmatpush1.msra.mxu0 %v83
    %85 = vmatprep.subr.mxu0 0.0
    %v86 = vand.u32 %v47, 4294901760
    %87 = vmatpush1.msra.mxu0 %v86
    %88 = vmatprep.subr.mxu0 0.0
    %v89 = vand.u32 %v48, 4294901760
    %90 = vmatpush1.msra.mxu0 %v89
    %91 = vmatprep.subr.mxu0 0.0
    %v92 = vand.u32 %v49, 4294901760
    %93 = vmatpush1.msra.mxu0 %v92
    %94 = vmatprep.subr.mxu0 0.0
    %v95 = vand.u32 %v50, 4294901760
    %96 = vmatpush1.msra.mxu0 %v95
    %97 = vmatprep.subr.mxu0 0.0
    %v98 = vand.u32 %v51, 4294901760
    %99 = vmatpush1.msra.mxu0 %v98
    %100 = vmatprep.subr.mxu0 0.0
    %v101 = vand.u32 %v52, 4294901760
    %102 = vmatpush1.msra.mxu0 %v101
    %103 = vmatprep.subr.mxu0 0.0
    %v104 = vand.u32 %v53, 4294901760
    %105 = vmatpush1.msra.mxu0 %v104
    %106 = vmatprep.subr.mxu0 0.0
    %v107 = vand.u32 %v54, 4294901760
    %108 = vmatpush1.msra.mxu0 %v107
    %109 = vmatprep.subr.mxu0 0.0
    %v110 = vand.u32 %v55, 4294901760
    %111 = vmatpush1.msra.mxu0 %v110
    %112 = vmatprep.subr.mxu0 0.0
    %v113 = vand.u32 %v56, 4294901760
    %114 = vmatpush1.msra.mxu0 %v113
    %115 = vmatprep.subr.mxu0 0.0
    %v116 = vand.u32 %v57, 4294901760
    %117 = vmatpush1.msra.mxu0 %v116
    %118 = vmatprep.subr.mxu0 0.0
    %v119 = vand.u32 %v58, 4294901760
    %120 = vmatpush1.msra.mxu0 %v119
    %121 = vmatprep.subr.mxu0 0.0
    %v122 = vand.u32 %v59, 4294901760
    %123 = vmatpush1.msra.mxu0 %v122
    %124 = vmatprep.subr.mxu0 0.0
    %v125 = vand.u32 %v60, 4294901760
    %126 = vmatpush1.msra.mxu0 %v125
    %127 = vmatprep.subr.mxu0 0.0
    %v128 = vand.u32 %v61, 4294901760
    %129 = vmatpush1.msra.mxu0 %v128
    %130 = vmatprep.subr.mxu0 0.0
    %v131 = vand.u32 %v62, 4294901760
    %132 = vmatpush1.msra.mxu0 %v131
    %133 = vmatprep.subr.mxu0 0.0
    %v134 = vand.u32 %v63, 4294901760
    %135 = vmatpush1.msra.mxu0 %v134
    %136 = vmatprep.subr.mxu0 0.0
    %v137 = vand.u32 %v64, 4294901760
    %138 = vmatpush1.msra.mxu0 %v137
    %139 = vmatprep.subr.mxu0 0.0
    %v140 = vand.u32 %v65, 4294901760
    %141 = vmatpush1.msra.mxu0 %v140
    %142 = vmatprep.subr.mxu0 0.0
    %v143 = vand.u32 %v66, 4294901760
    %144 = vmatpush1.msra.mxu0 %v143
    %145 = vmatprep.subr.mxu0 0.0
    %v146 = vand.u32 %v67, 4294901760
    %147 = vmatpush1.msra.mxu0 %v146
    %148 = vmatprep.subr.mxu0 0.0
    %v149 = vand.u32 %v68, 4294901760
    %150 = vmatpush1.msra.mxu0 %v149
    %151 = vmatprep.subr.mxu0 0.0
    %v152 = vand.u32 %v69, 4294901760
    %153 = vmatpush1.msra.mxu0 %v152
    %154 = vmatprep.subr.mxu0 0.0
    %v155 = vand.u32 %v70, 4294901760
    %156 = vmatpush1.msra.mxu0 %v155
    %157 = vmatprep.subr.mxu0 0.0
    %v158 = vand.u32 %v71, 4294901760
    %159 = vmatpush1.msra.mxu0 %v158
    %160 = vmatprep.subr.mxu0 0.0
    %v161 = vand.u32 %v72, 4294901760
    %162 = vmatpush1.msra.mxu0 %v161
    %163 = vmatprep.subr.mxu0 0.0
    %v164 = vand.u32 %v73, 4294901760
    %165 = vmatpush1.msra.mxu0 %v164
    %166 = vmatprep.subr.mxu0 0.0
    %v167 = vand.u32 %v74, 4294901760
    %168 = vmatpush1.msra.mxu0 %v167
    %169 = vmatprep.subr.mxu0 0.0
    %v170 = vand.u32 %v75, 4294901760
    %171 = vmatpush1.msra.mxu0 %v170
    %v172 = vand.u32 %v41, 4294901760
    %v173 = vsub.f32 %v41, %v172
    %v174 = vand.u32 %v173, 4294901760
    %v175 = vsub.f32 %v173, %v174
    %v176 = vand.u32 %v175, 4294901760
    %177 = vmatprep.mubr.f32.mxu0 %v176
    %v178 = vand.u32 %v40, 4294901760
    %v179 = vsub.f32 %v40, %v178
    %v180 = vand.u32 %v179, 4294901760
    %v181 = vsub.f32 %v179, %v180
    %v182 = vand.u32 %v181, 4294901760
    %183 = vmatmul.mubr.f32.gmra.mrb[0].mxu0 %v182
    %v184 = vpop.f32.mrb[0].mxu0
    %v185 = vadd.f32 0.0, %v184
    %v186 = vpop.f32.mrb[0].mxu0
    %v187 = vand.u32 %v43, 4294901760
    %v188 = vsub.f32 %v43, %v187
    %v189 = vand.u32 %v188, 4294901760
    %v190 = vsub.f32 %v188, %v189
    %v191 = vand.u32 %v190, 4294901760
    %192 = vmatprep.mubr.f32.mxu0 %v191
    %v193 = vand.u32 %v42, 4294901760
    %v194 = vsub.f32 %v42, %v193
    %v195 = vand.u32 %v194, 4294901760
    %v196 = vsub.f32 %v194, %v195
    %v197 = vand.u32 %v196, 4294901760
    %198 = vmatmul.mubr.f32.gmra.mrb[0].mxu0 %v197
    %v199 = vpop.f32.mrb[0].mxu0
    %v200 = vadd.f32 0.0, %v199
    %v201 = vpop.f32.mrb[0].mxu0
    %202 = vdwg.mxu0
    %203 = vmatprep.subr.mxu0 0.0
    %v204 = vand.u32 %v44, 4294901760
    %v205 = vsub.f32 %v44, %v204
    %v206 = vand.u32 %v205, 4294901760
    %v207 = vsub.f32 %v205, %v206
    %v208 = vand.u32 %v207, 4294901760
    %209 = vmatpush1.msra.mxu0 %v208
    %210 = vmatprep.subr.mxu0 0.0
    %v211 = vand.u32 %v45, 4294901760
    %v212 = vsub.f32 %v45, %v211
    %v213 = vand.u32 %v212, 4294901760
    %v214 = vsub.f32 %v212, %v213
    %v215 = vand.u32 %v214, 4294901760
    %216 = vmatpush1.msra.mxu0 %v215
    %217 = vmatprep.subr.mxu0 0.0
    %v218 = vand.u32 %v46, 4294901760
    %v219 = vsub.f32 %v46, %v218
    %v220 = vand.u32 %v219, 4294901760
    %v221 = vsub.f32 %v219, %v220
    %v222 = vand.u32 %v221, 4294901760
    %223 = vmatpush1.msra.mxu0 %v222
    %224 = vmatprep.subr.mxu0 0.0
    %v225 = vand.u32 %v47, 4294901760
    %v226 = vsub.f32 %v47, %v225
    %v227 = vand.u32 %v226, 4294901760
    %v228 = vsub.f32 %v226, %v227
    %v229 = vand.u32 %v228, 4294901760
    %230 = vmatpush1.msra.mxu0 %v229
    %231 = vmatprep.subr.mxu0 0.0
    %v232 = vand.u32 %v48, 4294901760
    %v233 = vsub.f32 %v48, %v232
    %v234 = vand.u32 %v233, 4294901760
    %v235 = vsub.f32 %v233, %v234
    %v236 = vand.u32 %v235, 4294901760
    %237 = vmatpush1.msra.mxu0 %v236
    %238 = vmatprep.subr.mxu0 0.0
    %v239 = vand.u32 %v49, 4294901760
    %v240 = vsub.f32 %v49, %v239
    %v241 = vand.u32 %v240, 4294901760
    %v242 = vsub.f32 %v240, %v241
    %v243 = vand.u32 %v242, 4294901760
    %244 = vmatpush1.msra.mxu0 %v243
    %245 = vmatprep.subr.mxu0 0.0
    %v246 = vand.u32 %v50, 4294901760
    %v247 = vsub.f32 %v50, %v246
    %v248 = vand.u32 %v247, 4294901760
    %v249 = vsub.f32 %v247, %v248
    %v250 = vand.u32 %v249, 4294901760
    %251 = vmatpush1.msra.mxu0 %v250
    %252 = vmatprep.subr.mxu0 0.0
    %v253 = vand.u32 %v51, 4294901760
    %v254 = vsub.f32 %v51, %v253
    %v255 = vand.u32 %v254, 4294901760
    %v256 = vsub.f32 %v254, %v255
    %v257 = vand.u32 %v256, 4294901760
    %258 = vmatpush1.msra.mxu0 %v257
    %259 = vmatprep.subr.mxu0 0.0
    %v260 = vand.u32 %v52, 4294901760
    %v261 = vsub.f32 %v52, %v260
    %v262 = vand.u32 %v261, 4294901760
    %v263 = vsub.f32 %v261, %v262
    %v264 = vand.u32 %v263, 4294901760
    %265 = vmatpush1.msra.mxu0 %v264
    %266 = vmatprep.subr.mxu0 0.0
    %v267 = vand.u32 %v53, 4294901760
    %v268 = vsub.f32 %v53, %v267
    %v269 = vand.u32 %v268, 4294901760
    %v270 = vsub.f32 %v268, %v269
    %v271 = vand.u32 %v270, 4294901760
    %272 = vmatpush1.msra.mxu0 %v271
    %273 = vmatprep.subr.mxu0 0.0
    %v274 = vand.u32 %v54, 4294901760
    %v275 = vsub.f32 %v54, %v274
    %v276 = vand.u32 %v275, 4294901760
    %v277 = vsub.f32 %v275, %v276
    %v278 = vand.u32 %v277, 4294901760
    %279 = vmatpush1.msra.mxu0 %v278
    %280 = vmatprep.subr.mxu0 0.0
    %v281 = vand.u32 %v55, 4294901760
    %v282 = vsub.f32 %v55, %v281
    %v283 = vand.u32 %v282, 4294901760
    %v284 = vsub.f32 %v282, %v283
    %v285 = vand.u32 %v284, 4294901760
    %286 = vmatpush1.msra.mxu0 %v285
    %287 = vmatprep.subr.mxu0 0.0
    %v288 = vand.u32 %v56, 4294901760
    %v289 = vsub.f32 %v56, %v288
    %v290 = vand.u32 %v289, 4294901760
    %v291 = vsub.f32 %v289, %v290
    %v292 = vand.u32 %v291, 4294901760
    %293 = vmatpush1.msra.mxu0 %v292
    %294 = vmatprep.subr.mxu0 0.0
    %v295 = vand.u32 %v57, 4294901760
    %v296 = vsub.f32 %v57, %v295
    %v297 = vand.u32 %v296, 4294901760
    %v298 = vsub.f32 %v296, %v297
    %v299 = vand.u32 %v298, 4294901760
    %300 = vmatpush1.msra.mxu0 %v299
    %301 = vmatprep.subr.mxu0 0.0
    %v302 = vand.u32 %v58, 4294901760
    %v303 = vsub.f32 %v58, %v302
    %v304 = vand.u32 %v303, 4294901760
    %v305 = vsub.f32 %v303, %v304
    %v306 = vand.u32 %v305, 4294901760
    %307 = vmatpush1.msra.mxu0 %v306
    %308 = vmatprep.subr.mxu0 0.0
    %v309 = vand.u32 %v59, 4294901760
    %v310 = vsub.f32 %v59, %v309
    %v311 = vand.u32 %v310, 4294901760
    %v312 = vsub.f32 %v310, %v311
    %v313 = vand.u32 %v312, 4294901760
    %314 = vmatpush1.msra.mxu0 %v313
    %315 = vmatprep.subr.mxu0 0.0
    %v316 = vand.u32 %v60, 4294901760
    %v317 = vsub.f32 %v60, %v316
    %v318 = vand.u32 %v317, 4294901760
    %v319 = vsub.f32 %v317, %v318
    %v320 = vand.u32 %v319, 4294901760
    %321 = vmatpush1.msra.mxu0 %v320
    %322 = vmatprep.subr.mxu0 0.0
    %v323 = vand.u32 %v61, 4294901760
    %v324 = vsub.f32 %v61, %v323
    %v325 = vand.u32 %v324, 4294901760
    %v326 = vsub.f32 %v324, %v325
    %v327 = vand.u32 %v326, 4294901760
    %328 = vmatpush1.msra.mxu0 %v327
    %329 = vmatprep.subr.mxu0 0.0
    %v330 = vand.u32 %v62, 4294901760
    %v331 = vsub.f32 %v62, %v330
    %v332 = vand.u32 %v331, 4294901760
    %v333 = vsub.f32 %v331, %v332
    %v334 = vand.u32 %v333, 4294901760
    %335 = vmatpush1.msra.mxu0 %v334
    %336 = vmatprep.subr.mxu0 0.0
    %v337 = vand.u32 %v63, 4294901760
    %v338 = vsub.f32 %v63, %v337
    %v339 = vand.u32 %v338, 4294901760
    %v340 = vsub.f32 %v338, %v339
    %v341 = vand.u32 %v340, 4294901760
    %342 = vmatpush1.msra.mxu0 %v341
    %343 = vmatprep.subr.mxu0 0.0
    %v344 = vand.u32 %v64, 4294901760
    %v345 = vsub.f32 %v64, %v344
    %v346 = vand.u32 %v345, 4294901760
    %v347 = vsub.f32 %v345, %v346
    %v348 = vand.u32 %v347, 4294901760
    %349 = vmatpush1.msra.mxu0 %v348
    %350 = vmatprep.subr.mxu0 0.0
    %v351 = vand.u32 %v65, 4294901760
    %v352 = vsub.f32 %v65, %v351
    %v353 = vand.u32 %v352, 4294901760
    %v354 = vsub.f32 %v352, %v353
    %v355 = vand.u32 %v354, 4294901760
    %356 = vmatpush1.msra.mxu0 %v355
    %357 = vmatprep.subr.mxu0 0.0
    %v358 = vand.u32 %v66, 4294901760
    %v359 = vsub.f32 %v66, %v358
    %v360 = vand.u32 %v359, 4294901760
    %v361 = vsub.f32 %v359, %v360
    %v362 = vand.u32 %v361, 4294901760
    %363 = vmatpush1.msra.mxu0 %v362
    %364 = vmatprep.subr.mxu0 0.0
    %v365 = vand.u32 %v67, 4294901760
    %v366 = vsub.f32 %v67, %v365
    %v367 = vand.u32 %v366, 4294901760
    %v368 = vsub.f32 %v366, %v367
    %v369 = vand.u32 %v368, 4294901760
    %370 = vmatpush1.msra.mxu0 %v369
    %371 = vmatprep.subr.mxu0 0.0
    %v372 = vand.u32 %v68, 4294901760
    %v373 = vsub.f32 %v68, %v372
    %v374 = vand.u32 %v373, 4294901760
    %v375 = vsub.f32 %v373, %v374
    %v376 = vand.u32 %v375, 4294901760
    %377 = vmatpush1.msra.mxu0 %v376
    %378 = vmatprep.subr.mxu0 0.0
    %v379 = vand.u32 %v69, 4294901760
    %v380 = vsub.f32 %v69, %v379
    %v381 = vand.u32 %v380, 4294901760
    %v382 = vsub.f32 %v380, %v381
    %v383 = vand.u32 %v382, 4294901760
    %384 = vmatpush1.msra.mxu0 %v383
    %385 = vmatprep.subr.mxu0 0.0
    %v386 = vand.u32 %v70, 4294901760
    %v387 = vsub.f32 %v70, %v386
    %v388 = vand.u32 %v387, 4294901760
    %v389 = vsub.f32 %v387, %v388
    %v390 = vand.u32 %v389, 4294901760
    %391 = vmatpush1.msra.mxu0 %v390
    %392 = vmatprep.subr.mxu0 0.0
    %v393 = vand.u32 %v71, 4294901760
    %v394 = vsub.f32 %v71, %v393
    %v395 = vand.u32 %v394, 4294901760
    %v396 = vsub.f32 %v394, %v395
    %v397 = vand.u32 %v396, 4294901760
    %398 = vmatpush1.msra.mxu0 %v397
    %399 = vmatprep.subr.mxu0 0.0
    %v400 = vand.u32 %v72, 4294901760
    %v401 = vsub.f32 %v72, %v400
    %v402 = vand.u32 %v401, 4294901760
    %v403 = vsub.f32 %v401, %v402
    %v404 = vand.u32 %v403, 4294901760
    %405 = vmatpush1.msra.mxu0 %v404
    %406 = vmatprep.subr.mxu0 0.0
    %v407 = vand.u32 %v73, 4294901760
    %v408 = vsub.f32 %v73, %v407
    %v409 = vand.u32 %v408, 4294901760
    %v410 = vsub.f32 %v408, %v409
    %v411 = vand.u32 %v410, 4294901760
    %412 = vmatpush1.msra.mxu0 %v411
    %413 = vmatprep.subr.mxu0 0.0
    %v414 = vand.u32 %v74, 4294901760
    %v415 = vsub.f32 %v74, %v414
    %v416 = vand.u32 %v415, 4294901760
    %v417 = vsub.f32 %v415, %v416
    %v418 = vand.u32 %v417, 4294901760
    %419 = vmatpush1.msra.mxu0 %v418
    %420 = vmatprep.subr.mxu0 0.0
    %v421 = vand.u32 %v75, 4294901760
    %v422 = vsub.f32 %v75, %v421
    %v423 = vand.u32 %v422, 4294901760
    %v424 = vsub.f32 %v422, %v423
    %v425 = vand.u32 %v424, 4294901760
    %426 = vmatpush1.msra.mxu0 %v425
    %v427 = vand.u32 %v41, 4294901760
    %428 = vmatprep.mubr.f32.mxu0 %v427
    %v429 = vand.u32 %v40, 4294901760
    %430 = vmatmul.mubr.f32.gmra.mrb[0].mxu0 %v429
    %v431 = vpop.f32.mrb[0].mxu0
    %v432 = vadd.f32 %v185, %v431
    %v433 = vpop.f32.mrb[0].mxu0
    %v434 = vand.u32 %v43, 4294901760
    %435 = vmatprep.mubr.f32.mxu0 %v434
    %v436 = vand.u32 %v42, 4294901760
    %437 = vmatmul.mubr.f32.gmra.mrb[0].mxu0 %v436
    %v438 = vpop.f32.mrb[0].mxu0
    %v439 = vadd.f32 %v200, %v438
    %v440 = vpop.f32.mrb[0].mxu0
    %441 = vdwg.mxu0
    %442 = vmatprep.subr.mxu0 0.0
    %v443 = vand.u32 %v44, 4294901760
    %v444 = vsub.f32 %v44, %v443
    %445 = vmatpush1.msra.mxu0 %v444
    %446 = vmatprep.subr.mxu0 0.0
    %v447 = vand.u32 %v45, 4294901760
    %v448 = vsub.f32 %v45, %v447
    %449 = vmatpush1.msra.mxu0 %v448
    %450 = vmatprep.subr.mxu0 0.0
    %v451 = vand.u32 %v46, 4294901760
    %v452 = vsub.f32 %v46, %v451
    %453 = vmatpush1.msra.mxu0 %v452
    %454 = vmatprep.subr.mxu0 0.0
    %v455 = vand.u32 %v47, 4294901760
    %v456 = vsub.f32 %v47, %v455
    %457 = vmatpush1.msra.mxu0 %v456
    %458 = vmatprep.subr.mxu0 0.0
    %v459 = vand.u32 %v48, 4294901760
    %v460 = vsub.f32 %v48, %v459
    %461 = vmatpush1.msra.mxu0 %v460
    %462 = vmatprep.subr.mxu0 0.0
    %v463 = vand.u32 %v49, 4294901760
    %v464 = vsub.f32 %v49, %v463
    %465 = vmatpush1.msra.mxu0 %v464
    %466 = vmatprep.subr.mxu0 0.0
    %v467 = vand.u32 %v50, 4294901760
    %v468 = vsub.f32 %v50, %v467
    %469 = vmatpush1.msra.mxu0 %v468
    %470 = vmatprep.subr.mxu0 0.0
    %v471 = vand.u32 %v51, 4294901760
    %v472 = vsub.f32 %v51, %v471
    %473 = vmatpush1.msra.mxu0 %v472
    %474 = vmatprep.subr.mxu0 0.0
    %v475 = vand.u32 %v52, 4294901760
    %v476 = vsub.f32 %v52, %v475
    %477 = vmatpush1.msra.mxu0 %v476
    %478 = vmatprep.subr.mxu0 0.0
    %v479 = vand.u32 %v53, 4294901760
    %v480 = vsub.f32 %v53, %v479
    %481 = vmatpush1.msra.mxu0 %v480
    %482 = vmatprep.subr.mxu0 0.0
    %v483 = vand.u32 %v54, 4294901760
    %v484 = vsub.f32 %v54, %v483
    %485 = vmatpush1.msra.mxu0 %v484
    %486 = vmatprep.subr.mxu0 0.0
    %v487 = vand.u32 %v55, 4294901760
    %v488 = vsub.f32 %v55, %v487
    %489 = vmatpush1.msra.mxu0 %v488
    %490 = vmatprep.subr.mxu0 0.0
    %v491 = vand.u32 %v56, 4294901760
    %v492 = vsub.f32 %v56, %v491
    %493 = vmatpush1.msra.mxu0 %v492
    %494 = vmatprep.subr.mxu0 0.0
    %v495 = vand.u32 %v57, 4294901760
    %v496 = vsub.f32 %v57, %v495
    %497 = vmatpush1.msra.mxu0 %v496
    %498 = vmatprep.subr.mxu0 0.0
    %v499 = vand.u32 %v58, 4294901760
    %v500 = vsub.f32 %v58, %v499
    %501 = vmatpush1.msra.mxu0 %v500
    %502 = vmatprep.subr.mxu0 0.0
    %v503 = vand.u32 %v59, 4294901760
    %v504 = vsub.f32 %v59, %v503
    %505 = vmatpush1.msra.mxu0 %v504
    %506 = vmatprep.subr.mxu0 0.0
    %v507 = vand.u32 %v60, 4294901760
    %v508 = vsub.f32 %v60, %v507
    %509 = vmatpush1.msra.mxu0 %v508
    %510 = vmatprep.subr.mxu0 0.0
    %v511 = vand.u32 %v61, 4294901760
    %v512 = vsub.f32 %v61, %v511
    %513 = vmatpush1.msra.mxu0 %v512
    %514 = vmatprep.subr.mxu0 0.0
    %v515 = vand.u32 %v62, 4294901760
    %v516 = vsub.f32 %v62, %v515
    %517 = vmatpush1.msra.mxu0 %v516
    %518 = vmatprep.subr.mxu0 0.0
    %v519 = vand.u32 %v63, 4294901760
    %v520 = vsub.f32 %v63, %v519
    %521 = vmatpush1.msra.mxu0 %v520
    %522 = vmatprep.subr.mxu0 0.0
    %v523 = vand.u32 %v64, 4294901760
    %v524 = vsub.f32 %v64, %v523
    %525 = vmatpush1.msra.mxu0 %v524
    %526 = vmatprep.subr.mxu0 0.0
    %v527 = vand.u32 %v65, 4294901760
    %v528 = vsub.f32 %v65, %v527
    %529 = vmatpush1.msra.mxu0 %v528
    %530 = vmatprep.subr.mxu0 0.0
    %v531 = vand.u32 %v66, 4294901760
    %v532 = vsub.f32 %v66, %v531
    %533 = vmatpush1.msra.mxu0 %v532
    %534 = vmatprep.subr.mxu0 0.0
    %v535 = vand.u32 %v67, 4294901760
    %v536 = vsub.f32 %v67, %v535
    %537 = vmatpush1.msra.mxu0 %v536
    %538 = vmatprep.subr.mxu0 0.0
    %v539 = vand.u32 %v68, 4294901760
    %v540 = vsub.f32 %v68, %v539
    %541 = vmatpush1.msra.mxu0 %v540
    %542 = vmatprep.subr.mxu0 0.0
    %v543 = vand.u32 %v69, 4294901760
    %v544 = vsub.f32 %v69, %v543
    %545 = vmatpush1.msra.mxu0 %v544
    %546 = vmatprep.subr.mxu0 0.0
    %v547 = vand.u32 %v70, 4294901760
    %v548 = vsub.f32 %v70, %v547
    %549 = vmatpush1.msra.mxu0 %v548
    %550 = vmatprep.subr.mxu0 0.0
    %v551 = vand.u32 %v71, 4294901760
    %v552 = vsub.f32 %v71, %v551
    %553 = vmatpush1.msra.mxu0 %v552
    %554 = vmatprep.subr.mxu0 0.0
    %v555 = vand.u32 %v72, 4294901760
    %v556 = vsub.f32 %v72, %v555
    %557 = vmatpush1.msra.mxu0 %v556
    %558 = vmatprep.subr.mxu0 0.0
    %v559 = vand.u32 %v73, 4294901760
    %v560 = vsub.f32 %v73, %v559
    %561 = vmatpush1.msra.mxu0 %v560
    %562 = vmatprep.subr.mxu0 0.0
    %v563 = vand.u32 %v74, 4294901760
    %v564 = vsub.f32 %v74, %v563
    %565 = vmatpush1.msra.mxu0 %v564
    %566 = vmatprep.subr.mxu0 0.0
    %v567 = vand.u32 %v75, 4294901760
    %v568 = vsub.f32 %v75, %v567
    %569 = vmatpush1.msra.mxu0 %v568
    %v570 = vand.u32 %v41, 4294901760
    %v571 = vsub.f32 %v41, %v570
    %572 = vmatprep.mubr.f32.mxu0 %v571
    %v573 = vand.u32 %v40, 4294901760
    %v574 = vsub.f32 %v40, %v573
    %575 = vmatmul.mubr.f32.gmra.mrb[0].mxu0 %v574
    %v576 = vpop.f32.mrb[0].mxu0
    %v577 = vadd.f32 %v432, %v576
    %v578 = vpop.f32.mrb[0].mxu0
    %v579 = vand.u32 %v43, 4294901760
    %v580 = vsub.f32 %v43, %v579
    %581 = vmatprep.mubr.f32.mxu0 %v580
    %v582 = vand.u32 %v42, 4294901760
    %v583 = vsub.f32 %v42, %v582
    %584 = vmatmul.mubr.f32.gmra.mrb[0].mxu0 %v583
    %v585 = vpop.f32.mrb[0].mxu0
    %v586 = vadd.f32 %v439, %v585
    %v587 = vpop.f32.mrb[0].mxu0
    %588 = vdwg.mxu0
    %589 = vmatprep.subr.mxu0 0.0
    %v590 = vand.u32 %v44, 4294901760
    %591 = vmatpush1.msra.mxu0 %v590
    %592 = vmatprep.subr.mxu0 0.0
    %v593 = vand.u32 %v45, 4294901760
    %594 = vmatpush1.msra.mxu0 %v593
    %595 = vmatprep.subr.mxu0 0.0
    %v596 = vand.u32 %v46, 4294901760
    %597 = vmatpush1.msra.mxu0 %v596
    %598 = vmatprep.subr.mxu0 0.0
    %v599 = vand.u32 %v47, 4294901760
    %600 = vmatpush1.msra.mxu0 %v599
    %601 = vmatprep.subr.mxu0 0.0
    %v602 = vand.u32 %v48, 4294901760
    %603 = vmatpush1.msra.mxu0 %v602
    %604 = vmatprep.subr.mxu0 0.0
    %v605 = vand.u32 %v49, 4294901760
    %606 = vmatpush1.msra.mxu0 %v605
    %607 = vmatprep.subr.mxu0 0.0
    %v608 = vand.u32 %v50, 4294901760
    %609 = vmatpush1.msra.mxu0 %v608
    %610 = vmatprep.subr.mxu0 0.0
    %v611 = vand.u32 %v51, 4294901760
    %612 = vmatpush1.msra.mxu0 %v611
    %613 = vmatprep.subr.mxu0 0.0
    %v614 = vand.u32 %v52, 4294901760
    %615 = vmatpush1.msra.mxu0 %v614
    %616 = vmatprep.subr.mxu0 0.0
    %v617 = vand.u32 %v53, 4294901760
    %618 = vmatpush1.msra.mxu0 %v617
    %619 = vmatprep.subr.mxu0 0.0
    %v620 = vand.u32 %v54, 4294901760
    %621 = vmatpush1.msra.mxu0 %v620
    %622 = vmatprep.subr.mxu0 0.0
    %v623 = vand.u32 %v55, 4294901760
    %624 = vmatpush1.msra.mxu0 %v623
    %625 = vmatprep.subr.mxu0 0.0
    %v626 = vand.u32 %v56, 4294901760
    %627 = vmatpush1.msra.mxu0 %v626
    %628 = vmatprep.subr.mxu0 0.0
    %v629 = vand.u32 %v57, 4294901760
    %630 = vmatpush1.msra.mxu0 %v629
    %631 = vmatprep.subr.mxu0 0.0
    %v632 = vand.u32 %v58, 4294901760
    %633 = vmatpush1.msra.mxu0 %v632
    %634 = vmatprep.subr.mxu0 0.0
    %v635 = vand.u32 %v59, 4294901760
    %636 = vmatpush1.msra.mxu0 %v635
    %637 = vmatprep.subr.mxu0 0.0
    %v638 = vand.u32 %v60, 4294901760
    %639 = vmatpush1.msra.mxu0 %v638
    %640 = vmatprep.subr.mxu0 0.0
    %v641 = vand.u32 %v61, 4294901760
    %642 = vmatpush1.msra.mxu0 %v641
    %643 = vmatprep.subr.mxu0 0.0
    %v644 = vand.u32 %v62, 4294901760
    %645 = vmatpush1.msra.mxu0 %v644
    %646 = vmatprep.subr.mxu0 0.0
    %v647 = vand.u32 %v63, 4294901760
    %648 = vmatpush1.msra.mxu0 %v647
    %649 = vmatprep.subr.mxu0 0.0
    %v650 = vand.u32 %v64, 4294901760
    %651 = vmatpush1.msra.mxu0 %v650
    %652 = vmatprep.subr.mxu0 0.0
    %v653 = vand.u32 %v65, 4294901760
    %654 = vmatpush1.msra.mxu0 %v653
    %655 = vmatprep.subr.mxu0 0.0
    %v656 = vand.u32 %v66, 4294901760
    %657 = vmatpush1.msra.mxu0 %v656
    %658 = vmatprep.subr.mxu0 0.0
    %v659 = vand.u32 %v67, 4294901760
    %660 = vmatpush1.msra.mxu0 %v659
    %661 = vmatprep.subr.mxu0 0.0
    %v662 = vand.u32 %v68, 4294901760
    %663 = vmatpush1.msra.mxu0 %v662
    %664 = vmatprep.subr.mxu0 0.0
    %v665 = vand.u32 %v69, 4294901760
    %666 = vmatpush1.msra.mxu0 %v665
    %667 = vmatprep.subr.mxu0 0.0
    %v668 = vand.u32 %v70, 4294901760
    %669 = vmatpush1.msra.mxu0 %v668
    %670 = vmatprep.subr.mxu0 0.0
    %v671 = vand.u32 %v71, 4294901760
    %672 = vmatpush1.msra.mxu0 %v671
    %673 = vmatprep.subr.mxu0 0.0
    %v674 = vand.u32 %v72, 4294901760
    %675 = vmatpush1.msra.mxu0 %v674
    %676 = vmatprep.subr.mxu0 0.0
    %v677 = vand.u32 %v73, 4294901760
    %678 = vmatpush1.msra.mxu0 %v677
    %679 = vmatprep.subr.mxu0 0.0
    %v680 = vand.u32 %v74, 4294901760
    %681 = vmatpush1.msra.mxu0 %v680
    %682 = vmatprep.subr.mxu0 0.0
    %v683 = vand.u32 %v75, 4294901760
    %684 = vmatpush1.msra.mxu0 %v683
    %v685 = vand.u32 %v41, 4294901760
    %v686 = vsub.f32 %v41, %v685
    %v687 = vand.u32 %v686, 4294901760
    %688 = vmatprep.mubr.f32.mxu0 %v687
    %v689 = vand.u32 %v40, 4294901760
    %v690 = vsub.f32 %v40, %v689
    %v691 = vand.u32 %v690, 4294901760
    %692 = vmatmul.mubr.f32.gmra.mrb[0].mxu0 %v691
    %v693 = vpop.f32.mrb[0].mxu0
    %v694 = vadd.f32 %v577, %v693
    %v695 = vpop.f32.mrb[0].mxu0
    %v696 = vand.u32 %v43, 4294901760
    %v697 = vsub.f32 %v43, %v696
    %v698 = vand.u32 %v697, 4294901760
    %699 = vmatprep.mubr.f32.mxu0 %v698
    %v700 = vand.u32 %v42, 4294901760
    %v701 = vsub.f32 %v42, %v700
    %v702 = vand.u32 %v701, 4294901760
    %703 = vmatmul.mubr.f32.gmra.mrb[0].mxu0 %v702
    %v704 = vpop.f32.mrb[0].mxu0
    %v705 = vadd.f32 %v586, %v704
    %v706 = vpop.f32.mrb[0].mxu0
    %707 = vdwg.mxu0
    %708 = vmatprep.subr.mxu0 0.0
    %v709 = vand.u32 %v44, 4294901760
    %v710 = vsub.f32 %v44, %v709
    %v711 = vand.u32 %v710, 4294901760
    %712 = vmatpush1.msra.mxu0 %v711
    %713 = vmatprep.subr.mxu0 0.0
    %v714 = vand.u32 %v45, 4294901760
    %v715 = vsub.f32 %v45, %v714
    %v716 = vand.u32 %v715, 4294901760
    %717 = vmatpush1.msra.mxu0 %v716
    %718 = vmatprep.subr.mxu0 0.0
    %v719 = vand.u32 %v46, 4294901760
    %v720 = vsub.f32 %v46, %v719
    %v721 = vand.u32 %v720, 4294901760
    %722 = vmatpush1.msra.mxu0 %v721
    %723 = vmatprep.subr.mxu0 0.0
    %v724 = vand.u32 %v47, 4294901760
    %v725 = vsub.f32 %v47, %v724
    %v726 = vand.u32 %v725, 4294901760
    %727 = vmatpush1.msra.mxu0 %v726
    %728 = vmatprep.subr.mxu0 0.0
    %v729 = vand.u32 %v48, 4294901760
    %v730 = vsub.f32 %v48, %v729
    %v731 = vand.u32 %v730, 4294901760
    %732 = vmatpush1.msra.mxu0 %v731
    %733 = vmatprep.subr.mxu0 0.0
    %v734 = vand.u32 %v49, 4294901760
    %v735 = vsub.f32 %v49, %v734
    %v736 = vand.u32 %v735, 4294901760
    %737 = vmatpush1.msra.mxu0 %v736
    %738 = vmatprep.subr.mxu0 0.0
    %v739 = vand.u32 %v50, 4294901760
    %v740 = vsub.f32 %v50, %v739
    %v741 = vand.u32 %v740, 4294901760
    %742 = vmatpush1.msra.mxu0 %v741
    %743 = vmatprep.subr.mxu0 0.0
    %v744 = vand.u32 %v51, 4294901760
    %v745 = vsub.f32 %v51, %v744
    %v746 = vand.u32 %v745, 4294901760
    %747 = vmatpush1.msra.mxu0 %v746
    %748 = vmatprep.subr.mxu0 0.0
    %v749 = vand.u32 %v52, 4294901760
    %v750 = vsub.f32 %v52, %v749
    %v751 = vand.u32 %v750, 4294901760
    %752 = vmatpush1.msra.mxu0 %v751
    %753 = vmatprep.subr.mxu0 0.0
    %v754 = vand.u32 %v53, 4294901760
    %v755 = vsub.f32 %v53, %v754
    %v756 = vand.u32 %v755, 4294901760
    %757 = vmatpush1.msra.mxu0 %v756
    %758 = vmatprep.subr.mxu0 0.0
    %v759 = vand.u32 %v54, 4294901760
    %v760 = vsub.f32 %v54, %v759
    %v761 = vand.u32 %v760, 4294901760
    %762 = vmatpush1.msra.mxu0 %v761
    %763 = vmatprep.subr.mxu0 0.0
    %v764 = vand.u32 %v55, 4294901760
    %v765 = vsub.f32 %v55, %v764
    %v766 = vand.u32 %v765, 4294901760
    %767 = vmatpush1.msra.mxu0 %v766
    %768 = vmatprep.subr.mxu0 0.0
    %v769 = vand.u32 %v56, 4294901760
    %v770 = vsub.f32 %v56, %v769
    %v771 = vand.u32 %v770, 4294901760
    %772 = vmatpush1.msra.mxu0 %v771
    %773 = vmatprep.subr.mxu0 0.0
    %v774 = vand.u32 %v57, 4294901760
    %v775 = vsub.f32 %v57, %v774
    %v776 = vand.u32 %v775, 4294901760
    %777 = vmatpush1.msra.mxu0 %v776
    %778 = vmatprep.subr.mxu0 0.0
    %v779 = vand.u32 %v58, 4294901760
    %v780 = vsub.f32 %v58, %v779
    %v781 = vand.u32 %v780, 4294901760
    %782 = vmatpush1.msra.mxu0 %v781
    %783 = vmatprep.subr.mxu0 0.0
    %v784 = vand.u32 %v59, 4294901760
    %v785 = vsub.f32 %v59, %v784
    %v786 = vand.u32 %v785, 4294901760
    %787 = vmatpush1.msra.mxu0 %v786
    %788 = vmatprep.subr.mxu0 0.0
    %v789 = vand.u32 %v60, 4294901760
    %v790 = vsub.f32 %v60, %v789
    %v791 = vand.u32 %v790, 4294901760
    %792 = vmatpush1.msra.mxu0 %v791
    %793 = vmatprep.subr.mxu0 0.0
    %v794 = vand.u32 %v61, 4294901760
    %v795 = vsub.f32 %v61, %v794
    %v796 = vand.u32 %v795, 4294901760
    %797 = vmatpush1.msra.mxu0 %v796
    %798 = vmatprep.subr.mxu0 0.0
    %v799 = vand.u32 %v62, 4294901760
    %v800 = vsub.f32 %v62, %v799
    %v801 = vand.u32 %v800, 4294901760
    %802 = vmatpush1.msra.mxu0 %v801
    %803 = vmatprep.subr.mxu0 0.0
    %v804 = vand.u32 %v63, 4294901760
    %v805 = vsub.f32 %v63, %v804
    %v806 = vand.u32 %v805, 4294901760
    %807 = vmatpush1.msra.mxu0 %v806
    %808 = vmatprep.subr.mxu0 0.0
    %v809 = vand.u32 %v64, 4294901760
    %v810 = vsub.f32 %v64, %v809
    %v811 = vand.u32 %v810, 4294901760
    %812 = vmatpush1.msra.mxu0 %v811
    %813 = vmatprep.subr.mxu0 0.0
    %v814 = vand.u32 %v65, 4294901760
    %v815 = vsub.f32 %v65, %v814
    %v816 = vand.u32 %v815, 4294901760
    %817 = vmatpush1.msra.mxu0 %v816
    %818 = vmatprep.subr.mxu0 0.0
    %v819 = vand.u32 %v66, 4294901760
    %v820 = vsub.f32 %v66, %v819
    %v821 = vand.u32 %v820, 4294901760
    %822 = vmatpush1.msra.mxu0 %v821
    %823 = vmatprep.subr.mxu0 0.0
    %v824 = vand.u32 %v67, 4294901760
    %v825 = vsub.f32 %v67, %v824
    %v826 = vand.u32 %v825, 4294901760
    %827 = vmatpush1.msra.mxu0 %v826
    %828 = vmatprep.subr.mxu0 0.0
    %v829 = vand.u32 %v68, 4294901760
    %v830 = vsub.f32 %v68, %v829
    %v831 = vand.u32 %v830, 4294901760
    %832 = vmatpush1.msra.mxu0 %v831
    %833 = vmatprep.subr.mxu0 0.0
    %v834 = vand.u32 %v69, 4294901760
    %v835 = vsub.f32 %v69, %v834
    %v836 = vand.u32 %v835, 4294901760
    %837 = vmatpush1.msra.mxu0 %v836
    %838 = vmatprep.subr.mxu0 0.0
    %v839 = vand.u32 %v70, 4294901760
    %v840 = vsub.f32 %v70, %v839
    %v841 = vand.u32 %v840, 4294901760
    %842 = vmatpush1.msra.mxu0 %v841
    %843 = vmatprep.subr.mxu0 0.0
    %v844 = vand.u32 %v71, 4294901760
    %v845 = vsub.f32 %v71, %v844
    %v846 = vand.u32 %v845, 4294901760
    %847 = vmatpush1.msra.mxu0 %v846
    %848 = vmatprep.subr.mxu0 0.0
    %v849 = vand.u32 %v72, 4294901760
    %v850 = vsub.f32 %v72, %v849
    %v851 = vand.u32 %v850, 4294901760
    %852 = vmatpush1.msra.mxu0 %v851
    %853 = vmatprep.subr.mxu0 0.0
    %v854 = vand.u32 %v73, 4294901760
    %v855 = vsub.f32 %v73, %v854
    %v856 = vand.u32 %v855, 4294901760
    %857 = vmatpush1.msra.mxu0 %v856
    %858 = vmatprep.subr.mxu0 0.0
    %v859 = vand.u32 %v74, 4294901760
    %v860 = vsub.f32 %v74, %v859
    %v861 = vand.u32 %v860, 4294901760
    %862 = vmatpush1.msra.mxu0 %v861
    %863 = vmatprep.subr.mxu0 0.0
    %v864 = vand.u32 %v75, 4294901760
    %v865 = vsub.f32 %v75, %v864
    %v866 = vand.u32 %v865, 4294901760
    %867 = vmatpush1.msra.mxu0 %v866
    %v868 = vand.u32 %v41, 4294901760
    %869 = vmatprep.mubr.f32.mxu0 %v868
    %v870 = vand.u32 %v40, 4294901760
    %871 = vmatmul.mubr.f32.gmra.mrb[0].mxu0 %v870
    %v872 = vpop.f32.mrb[0].mxu0
    %v873 = vadd.f32 %v694, %v872
    %v874 = vpop.f32.mrb[0].mxu0
    %v875 = vand.u32 %v43, 4294901760
    %876 = vmatprep.mubr.f32.mxu0 %v875
    %v877 = vand.u32 %v42, 4294901760
    %878 = vmatmul.mubr.f32.gmra.mrb[0].mxu0 %v877
    %v879 = vpop.f32.mrb[0].mxu0
    %v880 = vadd.f32 %v705, %v879
    %v881 = vpop.f32.mrb[0].mxu0
    %882 = vdwg.mxu0
    %883 = vmatprep.subr.mxu0 0.0
    %v884 = vand.u32 %v44, 4294901760
    %885 = vmatpush1.msra.mxu0 %v884
    %886 = vmatprep.subr.mxu0 0.0
    %v887 = vand.u32 %v45, 4294901760
    %888 = vmatpush1.msra.mxu0 %v887
    %889 = vmatprep.subr.mxu0 0.0
    %v890 = vand.u32 %v46, 4294901760
    %891 = vmatpush1.msra.mxu0 %v890
    %892 = vmatprep.subr.mxu0 0.0
    %v893 = vand.u32 %v47, 4294901760
    %894 = vmatpush1.msra.mxu0 %v893
    %895 = vmatprep.subr.mxu0 0.0
    %v896 = vand.u32 %v48, 4294901760
    %897 = vmatpush1.msra.mxu0 %v896
    %898 = vmatprep.subr.mxu0 0.0
    %v899 = vand.u32 %v49, 4294901760
    %900 = vmatpush1.msra.mxu0 %v899
    %901 = vmatprep.subr.mxu0 0.0
    %v902 = vand.u32 %v50, 4294901760
    %903 = vmatpush1.msra.mxu0 %v902
    %904 = vmatprep.subr.mxu0 0.0
    %v905 = vand.u32 %v51, 4294901760
    %906 = vmatpush1.msra.mxu0 %v905
    %907 = vmatprep.subr.mxu0 0.0
    %v908 = vand.u32 %v52, 4294901760
    %909 = vmatpush1.msra.mxu0 %v908
    %910 = vmatprep.subr.mxu0 0.0
    %v911 = vand.u32 %v53, 4294901760
    %912 = vmatpush1.msra.mxu0 %v911
    %913 = vmatprep.subr.mxu0 0.0
    %v914 = vand.u32 %v54, 4294901760
    %915 = vmatpush1.msra.mxu0 %v914
    %916 = vmatprep.subr.mxu0 0.0
    %v917 = vand.u32 %v55, 4294901760
    %918 = vmatpush1.msra.mxu0 %v917
    %919 = vmatprep.subr.mxu0 0.0
    %v920 = vand.u32 %v56, 4294901760
    %921 = vmatpush1.msra.mxu0 %v920
    %922 = vmatprep.subr.mxu0 0.0
    %v923 = vand.u32 %v57, 4294901760
    %924 = vmatpush1.msra.mxu0 %v923
    %925 = vmatprep.subr.mxu0 0.0
    %v926 = vand.u32 %v58, 4294901760
    %927 = vmatpush1.msra.mxu0 %v926
    %928 = vmatprep.subr.mxu0 0.0
    %v929 = vand.u32 %v59, 4294901760
    %930 = vmatpush1.msra.mxu0 %v929
    %931 = vmatprep.subr.mxu0 0.0
    %v932 = vand.u32 %v60, 4294901760
    %933 = vmatpush1.msra.mxu0 %v932
    %934 = vmatprep.subr.mxu0 0.0
    %v935 = vand.u32 %v61, 4294901760
    %936 = vmatpush1.msra.mxu0 %v935
    %937 = vmatprep.subr.mxu0 0.0
    %v938 = vand.u32 %v62, 4294901760
    %939 = vmatpush1.msra.mxu0 %v938
    %940 = vmatprep.subr.mxu0 0.0
    %v941 = vand.u32 %v63, 4294901760
    %942 = vmatpush1.msra.mxu0 %v941
    %943 = vmatprep.subr.mxu0 0.0
    %v944 = vand.u32 %v64, 4294901760
    %945 = vmatpush1.msra.mxu0 %v944
    %946 = vmatprep.subr.mxu0 0.0
    %v947 = vand.u32 %v65, 4294901760
    %948 = vmatpush1.msra.mxu0 %v947
    %949 = vmatprep.subr.mxu0 0.0
    %v950 = vand.u32 %v66, 4294901760
    %951 = vmatpush1.msra.mxu0 %v950
    %952 = vmatprep.subr.mxu0 0.0
    %v953 = vand.u32 %v67, 4294901760
    %954 = vmatpush1.msra.mxu0 %v953
    %955 = vmatprep.subr.mxu0 0.0
    %v956 = vand.u32 %v68, 4294901760
    %957 = vmatpush1.msra.mxu0 %v956
    %958 = vmatprep.subr.mxu0 0.0
    %v959 = vand.u32 %v69, 4294901760
    %960 = vmatpush1.msra.mxu0 %v959
    %961 = vmatprep.subr.mxu0 0.0
    %v962 = vand.u32 %v70, 4294901760
    %963 = vmatpush1.msra.mxu0 %v962
    %964 = vmatprep.subr.mxu0 0.0
    %v965 = vand.u32 %v71, 4294901760
    %966 = vmatpush1.msra.mxu0 %v965
    %967 = vmatprep.subr.mxu0 0.0
    %v968 = vand.u32 %v72, 4294901760
    %969 = vmatpush1.msra.mxu0 %v968
    %970 = vmatprep.subr.mxu0 0.0
    %v971 = vand.u32 %v73, 4294901760
    %972 = vmatpush1.msra.mxu0 %v971
    %973 = vmatprep.subr.mxu0 0.0
    %v974 = vand.u32 %v74, 4294901760
    %975 = vmatpush1.msra.mxu0 %v974
    %976 = vmatprep.subr.mxu0 0.0
    %v977 = vand.u32 %v75, 4294901760
    %978 = vmatpush1.msra.mxu0 %v977
    %v979 = vand.u32 %v41, 4294901760
    %980 = vmatprep.mubr.f32.mxu0 %v979
    %v981 = vand.u32 %v40, 4294901760
    %982 = vmatmul.mubr.f32.gmra.mrb[0].mxu0 %v981
    %v983 = vpop.f32.mrb[0].mxu0
    %v984 = vadd.f32 %v873, %v983
    %v985 = vpop.f32.mrb[0].mxu0
    %v986 = vand.u32 %v43, 4294901760
    %987 = vmatprep.mubr.f32.mxu0 %v986
    %v988 = vand.u32 %v42, 4294901760
    %989 = vmatmul.mubr.f32.gmra.mrb[0].mxu0 %v988
    %v990 = vpop.f32.mrb[0].mxu0
    %v991 = vadd.f32 %v880, %v990
    %v992 = vpop.f32.mrb[0].mxu0
    %993 = vdwg.mxu0
    %v994 = vmul.f32 %v984, %v984
    %v995 = vmul.f32 %v991, %v991
    %996 = vadd.xlane.f32.xlu0 %v994
    %v997 = vpop.xlane.xlu0 %996
    %998 = vadd.xlane.f32.xlu0 %v995
    %v999 = vpop.xlane.xlu0 %998
    %1000 = vxpose.xlu0.b32.start [1/16] %v997, 128
    %1001 = vxpose.xlu0.b32.cont [2/16] %v999, 128
    %1002 = vxpose.xlu0.b32.cont [3/16] 0.0, 128
    %1003 = vxpose.xlu0.b32.cont [4/16] 0.0, 128
    %1004 = vxpose.xlu0.b32.cont [5/16] 0.0, 128
    %1005 = vxpose.xlu0.b32.cont [6/16] 0.0, 128
    %1006 = vxpose.xlu0.b32.cont [7/16] 0.0, 128
    %1007 = vxpose.xlu0.b32.cont [8/16] 0.0, 128
    %1008 = vxpose.xlu0.b32.cont [9/16] 0.0, 128
    %1009 = vxpose.xlu0.b32.cont [10/16] 0.0, 128
    %1010 = vxpose.xlu0.b32.cont [11/16] 0.0, 128
    %1011 = vxpose.xlu0.b32.cont [12/16] 0.0, 128
    %1012 = vxpose.xlu0.b32.cont [13/16] 0.0, 128
    %1013 = vxpose.xlu0.b32.cont [14/16] 0.0, 128
    %1014 = vxpose.xlu0.b32.cont [15/16] 0.0, 128
    %1015 = vxpose.xlu0.b32.end [16/16] 0.0, 128
    %v1016 = vpop.trf.xlu0
    %v1017 = vpop.trf.xlu0
    %v1018 = vpop.trf.xlu0
    %v1019 = vpop.trf.xlu0
    %v1020 = vpop.trf.xlu0
    %v1021 = vpop.trf.xlu0
    %v1022 = vpop.trf.xlu0
    %v1023 = vpop.trf.xlu0
    %v1024 = vpop.trf.xlu0
    %v1025 = vpop.trf.xlu0
    %v1026 = vpop.trf.xlu0
    %v1027 = vpop.trf.xlu0
    %v1028 = vpop.trf.xlu0
    %v1029 = vpop.trf.xlu0
    %v1030 = vpop.trf.xlu0
    %v1031 = vpop.trf.xlu0
    %vm1032 = vcmask 122880
    %1033 = vst.msk [vmem:[#allocation7] sm:$0x1] %vm1032, %v1016
    // Predicated region
    $region18: #{tpu_custom_call.1} parent=1 // pred_check
      _
    $region19: #{tpu_custom_call.1} parent=1 // pred_check_branch
      %1035 = sbr.rel (0) target = $region21
    $region20: #{tpu_custom_call.1} parent=1 // pred_region
      %s1037 = ssub.s32 16, 16
      %1038 = vsyncadd [#allocation4], %s1037
      %s1040 = sshll.u32 [#allocation7], 4
      %s1041 = int_to_ptr.vmem [resolvable:$true] %s1040
      %1043 = dma.vmem_to_hbm [thread:$0]  %s1041, 16, %s2, [#allocation4]
    $region21: #{tpu_custom_call.1} parent=1 // pred_fallthru
      _
    // Predicated region
    $region22: #{tpu_custom_call.1} parent=1 // pred_check
      _
    $region23: #{tpu_custom_call.1} parent=1 // pred_check_branch
      %1045 = sbr.rel (0) target = $region25
    $region24: #{tpu_custom_call.1} parent=1 // pred_region
      %1046 = dma.done [#allocation4], 16
    $region25: #{tpu_custom_call.1} parent=1 // pred_fallthru
      _
    %1047 = vsyncpa [#allocation3], 1
    %1048 = vsyncpa [#allocation6], 1
    %1049 = vsyncpa [#allocation4], 1

</llo_original>
